<compile_context>
chip_gen: v7x
topology: tpu7x:2x2x1
jax: 0.10.0
libtpu: 0.0.40
codegen_flags: <defaults>
</compile_context>

<pallas_src>
import functools

import jax
import jax.numpy as jnp
from jax.experimental import pallas as pl
from jax.experimental.pallas import tpu as pltpu


def _dilated_residual_kernel(dilation, T, xpad_ref, mask_ref,
                             wd_ref, bd_ref, w1_ref, b1_ref, o_ref):
    """One block of `nblk` batch elements per grid step.

    xpad_ref : (nblk, T + 2*d, Cpad)  zero-padded input (batch, time, channels)
    mask_ref : (nblk, T, 1)           mask[:, 0:1, :] transposed to (time, 1)
    wd_ref   : (3*Cpad, Cpad)         fused dilated-conv weights (tap-major rows)
    bd_ref   : (1, Cpad)              dilated-conv bias
    w1_ref   : (Cpad, Cpad)           1x1-conv weights
    b1_ref   : (1, Cpad)              1x1-conv bias
    o_ref    : (nblk, T, Cpad)        output
    """
    nblk, _, cpad = xpad_ref.shape
    M = nblk * T

    # Three shifted views of the padded input; the centre tap (offset d) is
    # exactly the un-padded x and is reused below for the residual branch.
    taps = [xpad_ref[:, pl.ds(k * dilation, T), :].reshape(M, cpad)
            for k in range(3)]

    # Fused kernel-size-3 dilated conv: one matmul with K = 3*Cpad.
    xcat = jnp.concatenate(taps, axis=-1)                     # (M, 3*Cpad)
    acc = jnp.dot(xcat, wd_ref[...], preferred_element_type=jnp.float32)
    acc = jnp.maximum(acc + bd_ref[...], 0.0)                 # bias + ReLU

    # 1x1 conv.
    out = jnp.dot(acc, w1_ref[...],
                  preferred_element_type=jnp.float32) + b1_ref[...]
    # TODO(synk): nn.Dropout() is identity in eval mode; training-mode dropout
    # would need pltpu.prng_seed / prng_random_bits before the residual add.

    # Residual (centre tap == x) + mask broadcast over channels.
    res = (taps[1] + out).reshape(nblk, T, cpad) * mask_ref[...]
    o_ref[...] = res.astype(o_ref.dtype)


def dilated_residual_layer(x_nct, mask_nct, params, dilation):
    """x_nct: (N, Cin, T) f32, mask_nct: (N, Cm, T) f32. Returns (N, Cout, T)."""
    wd, bd, w1, b1 = params           # (3,Cin,Cout), (Cout,), (Cout,Cout), (Cout,)
    N, Cin, T = x_nct.shape
    Cout = w1.shape[-1]
    d = int(dilation)

    LANE = 128
    Cpad = ((max(Cin, Cout) + LANE - 1) // LANE) * LANE

    # Pack batch elements per grid step so the matmul M dim targets ~128-256
    # rows (nblk must divide N so every block is full).
    nblk = max(1, min(N, 256 // max(T, 1)))
    while N % nblk:
        nblk -= 1
    grid = (N // nblk,)

    # NCT -> NTC with the time halo and channel pad fused into the (required)
    # layout change: a single HBM materialisation of the activations.
    x = jnp.transpose(x_nct, (0, 2, 1))                        # (N, T, Cin)
    xpad = jnp.pad(x, ((0, 0), (d, d), (0, Cpad - Cin)))       # (N, T+2d, Cpad)
    mask_row = jnp.transpose(mask_nct[:, 0:1, :], (0, 2, 1))   # (N, T, 1)

    # Fused tap weights: (3, Cin, Cout) -> (3*Cpad, Cpad); tap-major row order
    # matches the channel-concat of the shifted slices inside the kernel.
    wdp = jnp.pad(wd, ((0, 0), (0, Cpad - Cin), (0, Cpad - Cout)))
    wdp = wdp.reshape(3 * Cpad, Cpad)
    w1p = jnp.pad(w1, ((0, Cpad - Cout), (0, Cpad - Cout)))
    bdp = jnp.pad(bd, (0, Cpad - Cout)).reshape(1, Cpad)
    b1p = jnp.pad(b1, (0, Cpad - Cout)).reshape(1, Cpad)

    Tp = T + 2 * d
    kernel = functools.partial(_dilated_residual_kernel, d, T)

    out_ntc = pl.pallas_call(
        kernel,
        out_shape=jax.ShapeDtypeStruct((N, T, Cpad), x.dtype),
        grid=grid,
        in_specs=[
            pl.BlockSpec((nblk, Tp, Cpad), lambda i: (i, 0, 0)),   # activations
            pl.BlockSpec((nblk, T, 1), lambda i: (i, 0, 0)),       # mask row
            pl.BlockSpec((3 * Cpad, Cpad), lambda i: (0, 0)),      # fused conv w
            pl.BlockSpec((1, Cpad), lambda i: (0, 0)),             # conv bias
            pl.BlockSpec((Cpad, Cpad), lambda i: (0, 0)),          # 1x1 w
            pl.BlockSpec((1, Cpad), lambda i: (0, 0)),             # 1x1 bias
        ],
        out_specs=pl.BlockSpec((nblk, T, Cpad), lambda i: (i, 0, 0)),
        compiler_params=pltpu.CompilerParams(
            dimension_semantics=("parallel",)),
    )(xpad, mask_row, wdp, bdp, w1p, b1p)

    # Strip channel pad; NTC -> NCT (fused with the required output transpose).
    return jnp.transpose(out_ntc[..., :Cout], (0, 2, 1))


def reference(x_nct, mask_nct, params, dilation):
    """Pure-JAX reference of the PyTorch forward (eval mode)."""
    wd, bd, w1, b1 = params
    N, Cin, T = x_nct.shape
    d = int(dilation)
    x = jnp.transpose(x_nct, (0, 2, 1))                        # (N, T, Cin)
    xpad = jnp.pad(x, ((0, 0), (d, d), (0, 0)))
    acc = bd[None, None, :]
    for k in range(3):
        acc = acc + jnp.einsum("ntc,cd->ntd", xpad[:, k * d:k * d + T, :], wd[k])
    acc = jnp.maximum(acc, 0.0)
    out = jnp.einsum("ntc,cd->ntd", acc, w1) + b1[None, None, :]
    res = (x + out) * jnp.transpose(mask_nct[:, 0:1, :], (0, 2, 1))
    return jnp.transpose(res, (0, 2, 1))


if __name__ == "__main__":
    # Small, conv-friendly shapes: N=2, in=out=channels=64, T=16, dilation=2
    N, C, T = 2, 64, 16
    dilation = 2

    key = jax.random.PRNGKey(0)
    k1, k2, k3, k4, k5, k6 = jax.random.split(key, 6)

    x = jax.random.normal(k1, (N, C, T), dtype=jnp.float32)
    mask = (jax.random.uniform(k2, (N, C, T)) > 0.2).astype(jnp.float32)

    # Deterministic parameter init (shapes per nn.Conv1d(in, out, 3) / (out, out, 1)).
    # Stored as (tap, cin, cout) and (cin, cout) for the matmul formulation.
    scale3 = 1.0 / (C * 3) ** 0.5
    scale1 = 1.0 / C ** 0.5
    wd = jax.random.uniform(k3, (3, C, C), minval=-scale3, maxval=scale3,
                            dtype=jnp.float32)
    bd = jax.random.uniform(k4, (C,), minval=-scale3, maxval=scale3,
                            dtype=jnp.float32)
    w1 = jax.random.uniform(k5, (C, C), minval=-scale1, maxval=scale1,
                            dtype=jnp.float32)
    b1 = jax.random.uniform(k6, (C,), minval=-scale1, maxval=scale1,
                            dtype=jnp.float32)
    params = (wd, bd, w1, b1)

    out = dilated_residual_layer(x, mask, params, dilation)
    out = jax.block_until_ready(out)

    ref = reference(x, mask, params, dilation)
    assert out.shape == (N, C, T)
    assert jnp.allclose(out, ref, atol=1e-4, rtol=1e-4), "mismatch vs reference"

    print("KERNEL_OK")
</pallas_src>

<mosaic_0001>
module attributes {stable_mosaic.version = 11 : i64} {
  func.func @_dilated_residual_kernel(%arg0: i32, %arg1: memref<2x20x128xf32, #tpu.memory_space<vmem>>, %arg2: memref<2x16x1xf32, #tpu.memory_space<vmem>>, %arg3: memref<384x128xf32, #tpu.memory_space<vmem>>, %arg4: memref<1x128xf32, #tpu.memory_space<vmem>>, %arg5: memref<128x128xf32, #tpu.memory_space<vmem>>, %arg6: memref<1x128xf32, #tpu.memory_space<vmem>>, %arg7: memref<2x16x128xf32, #tpu.memory_space<vmem>>) attributes {dimension_semantics = [#tpu.dimension_semantics<parallel>], iteration_bounds = array<i64: 1>, scalar_prefetch = 0 : i64, scratch_operands = 0 : i64, tpu.core_type = #tpu.core_type<tc>, window_params = [{transform_indices = @transform_0, window_bounds = array<i64: 2, 20, 128>}, {transform_indices = @transform_1, window_bounds = array<i64: 2, 16, 1>}, {pipeline_mode = #tpu.pipeline_mode<synchronous>, transform_indices = @transform_2, window_bounds = array<i64: 384, 128>}, {pipeline_mode = #tpu.pipeline_mode<synchronous>, transform_indices = @transform_3, window_bounds = array<i64: 1, 128>}, {pipeline_mode = #tpu.pipeline_mode<synchronous>, transform_indices = @transform_4, window_bounds = array<i64: 128, 128>}, {pipeline_mode = #tpu.pipeline_mode<synchronous>, transform_indices = @transform_5, window_bounds = array<i64: 1, 128>}, {transform_indices = @transform_6, window_bounds = array<i64: 2, 16, 128>}]} {
    %c0 = arith.constant 0 : index
    %c0_0 = arith.constant 0 : index
    %c0_1 = arith.constant 0 : index
    %0 = vector.load %arg1[%c0, %c0_0, %c0_1] : memref<2x20x128xf32, #tpu.memory_space<vmem>>, vector<2x16x128xf32>
    %1 = vector.shape_cast %0 : vector<2x16x128xf32> to vector<32x128xf32>
    %c0_2 = arith.constant 0 : index
    %c2 = arith.constant 2 : index
    %c0_3 = arith.constant 0 : index
    %2 = vector.load %arg1[%c0_2, %c2, %c0_3] : memref<2x20x128xf32, #tpu.memory_space<vmem>>, vector<2x16x128xf32>
    %3 = vector.shape_cast %2 : vector<2x16x128xf32> to vector<32x128xf32>
    %c0_4 = arith.constant 0 : index
    %c4 = arith.constant 4 : index
    %c0_5 = arith.constant 0 : index
    %4 = vector.load %arg1[%c0_4, %c4, %c0_5] : memref<2x20x128xf32, #tpu.memory_space<vmem>>, vector<2x16x128xf32>
    %5 = vector.shape_cast %4 : vector<2x16x128xf32> to vector<32x128xf32>
    %6 = tpu.concatenate %1, %3, %5 in 1 : vector<32x128xf32>, vector<32x128xf32>, vector<32x128xf32> -> vector<32x384xf32>
    %c0_6 = arith.constant 0 : index
    %c0_7 = arith.constant 0 : index
    %7 = vector.load %arg3[%c0_6, %c0_7] : memref<384x128xf32, #tpu.memory_space<vmem>>, vector<384x128xf32>
    %cst = arith.constant dense<0.000000e+00> : vector<32x128xf32>
    %8 = tpu.matmul %6, %7, %cst {dimension_numbers = #tpu.dot_dimension_numbers<[1], [0], [0], [1], [0, 0, 1, 1], [], []>} : vector<32x384xf32>, vector<384x128xf32>, vector<32x128xf32> -> vector<32x128xf32>
    %c0_8 = arith.constant 0 : index
    %c0_9 = arith.constant 0 : index
    %9 = vector.load %arg4[%c0_8, %c0_9] : memref<1x128xf32, #tpu.memory_space<vmem>>, vector<1x128xf32>
    %10 = vector.broadcast %9 : vector<1x128xf32> to vector<32x128xf32>
    %11 = arith.addf %8, %10 : vector<32x128xf32>
    %cst_10 = arith.constant 0.000000e+00 : f32
    %12 = vector.broadcast %cst_10 : f32 to vector<32x128xf32>
    %13 = arith.maximumf %11, %12 : vector<32x128xf32>
    %c0_11 = arith.constant 0 : index
    %c0_12 = arith.constant 0 : index
    %14 = vector.load %arg5[%c0_11, %c0_12] : memref<128x128xf32, #tpu.memory_space<vmem>>, vector<128x128xf32>
    %cst_13 = arith.constant dense<0.000000e+00> : vector<32x128xf32>
    %15 = tpu.matmul %13, %14, %cst_13 {dimension_numbers = #tpu.dot_dimension_numbers<[1], [0], [0], [1], [0, 0, 1, 1], [], []>} : vector<32x128xf32>, vector<128x128xf32>, vector<32x128xf32> -> vector<32x128xf32>
    %c0_14 = arith.constant 0 : index
    %c0_15 = arith.constant 0 : index
    %16 = vector.load %arg6[%c0_14, %c0_15] : memref<1x128xf32, #tpu.memory_space<vmem>>, vector<1x128xf32>
    %17 = vector.broadcast %16 : vector<1x128xf32> to vector<32x128xf32>
    %18 = arith.addf %15, %17 : vector<32x128xf32>
    %19 = arith.addf %3, %18 : vector<32x128xf32>
    %20 = vector.shape_cast %19 : vector<32x128xf32> to vector<2x16x128xf32>
    %c0_16 = arith.constant 0 : index
    %c0_17 = arith.constant 0 : index
    %c0_18 = arith.constant 0 : index
    %21 = vector.load %arg2[%c0_16, %c0_17, %c0_18] : memref<2x16x1xf32, #tpu.memory_space<vmem>>, vector<2x16x1xf32>
    %22 = vector.broadcast %21 : vector<2x16x1xf32> to vector<2x16x128xf32>
    %23 = arith.mulf %20, %22 : vector<2x16x128xf32>
    %c0_19 = arith.constant 0 : index
    %c0_20 = arith.constant 0 : index
    %c0_21 = arith.constant 0 : index
    %24 = vector.load %arg7[%c0_19, %c0_20, %c0_21] : memref<2x16x128xf32, #tpu.memory_space<vmem>>, vector<2x16x128xf32>
    tpu.vector_store %arg7[%c0_19, %c0_20, %c0_21], %23 {strides = array<i32>} : memref<2x16x128xf32, #tpu.memory_space<vmem>>, vector<2x16x128xf32>,
    return
  }
  func.func @transform_0(%arg0: i32) -> (i32, i32, i32) {
    %c0_i32 = arith.constant 0 : i32
    %c0_i32_0 = arith.constant 0 : i32
    %c0_i32_1 = arith.constant 0 : i32
    return %arg0, %c0_i32, %c0_i32_0 : i32, i32, i32
  }
  func.func @transform_1(%arg0: i32) -> (i32, i32, i32) {
    %c0_i32 = arith.constant 0 : i32
    %c0_i32_0 = arith.constant 0 : i32
    %c0_i32_1 = arith.constant 0 : i32
    return %arg0, %c0_i32, %c0_i32_0 : i32, i32, i32
  }
  func.func @transform_2(%arg0: i32) -> (i32, i32) {
    %c0_i32 = arith.constant 0 : i32
    %c0_i32_0 = arith.constant 0 : i32
    %c0_i32_1 = arith.constant 0 : i32
    return %c0_i32, %c0_i32_0 : i32, i32
  }
  func.func @transform_3(%arg0: i32) -> (i32, i32) {
    %c0_i32 = arith.constant 0 : i32
    %c0_i32_0 = arith.constant 0 : i32
    %c0_i32_1 = arith.constant 0 : i32
    return %c0_i32, %c0_i32_0 : i32, i32
  }
  func.func @transform_4(%arg0: i32) -> (i32, i32) {
    %c0_i32 = arith.constant 0 : i32
    %c0_i32_0 = arith.constant 0 : i32
    %c0_i32_1 = arith.constant 0 : i32
    return %c0_i32, %c0_i32_0 : i32, i32
  }
  func.func @transform_5(%arg0: i32) -> (i32, i32) {
    %c0_i32 = arith.constant 0 : i32
    %c0_i32_0 = arith.constant 0 : i32
    %c0_i32_1 = arith.constant 0 : i32
    return %c0_i32, %c0_i32_0 : i32, i32
  }
  func.func @transform_6(%arg0: i32) -> (i32, i32, i32) {
    %c0_i32 = arith.constant 0 : i32
    %c0_i32_0 = arith.constant 0 : i32
    %c0_i32_1 = arith.constant 0 : i32
    return %arg0, %c0_i32, %c0_i32_0 : i32, i32, i32
  }
}

</mosaic_0001>

<llo_original>
// kernel: tpu_custom_call.1
$region0: #{tpu_custom_call.1}
  #allocation0 [shape = 'u32[]', space=smem, size = 0x4, offset = 0x4, fixed_abs, tag = 'smem constant byte address 0x4 - core index']
  #allocation1 [shape = 'u32[144,128]{1,0:T(1,128)}', space=vmem, size = 0x12000, scoped, tag = 'internal scratch']
  %s0 = inlined_call_operand.vmem [shape: f32[2,20,128], index: 0, kind: input, shape index: {}]
  %s1 = inlined_call_operand.vmem [shape: f32[2,16,1], index: 1, kind: input, shape index: {}]
  %s2 = inlined_call_operand.hbm [shape: f32[384,128], index: 2, kind: input, shape index: {}]
  %s3 = inlined_call_operand.vmem [shape: f32[1,128], index: 3, kind: input, shape index: {}]
  %s4 = inlined_call_operand.vmem [shape: f32[128,128], index: 4, kind: input, shape index: {}]
  %s5 = inlined_call_operand.vmem [shape: f32[1,128], index: 5, kind: input, shape index: {}]
  %s6 = inlined_call_operand.hbm [shape: f32[2,16,128], index: 6, kind: output, shape index: {}]
  %s7 = sld [smem:[#allocation0]]
  $region38: #{tpu_custom_call.1} parent=0
    _
  %s9 = ssub.s32 1, %s7
  %s10 = scalar_select 0, %s9, %s7
  $region1: #{tpu_custom_call.1} parent=0
    #allocation2 [shape = 'u8[196608]{0}', space=vmem, size = 0x30000, scoped, tag = 'input window, operand 2, single buffered']
    #allocation3 [shape = 's32[1]{0}', space=sflag, size = 0x4, scoped, tag = 'scoped memory for tpu_custom_call.1']
    #allocation4 [shape = 's32[1]{0}', space=sflag, size = 0x4, scoped, tag = 'scoped memory for tpu_custom_call.1']
    #allocation5 [shape = 'u8[16384]{0}', space=vmem, size = 0x4000, scoped, tag = 'output window, operand 0, single buffered']
    %11 = vsyncpa [#allocation3], 0
    %12 = vsyncpa [#allocation4], 0
    // Predicated region
    $region2: #{tpu_custom_call.1} parent=1 // pred_check
      _
    $region3: #{tpu_custom_call.1} parent=1 // pred_check_branch
      %14 = sbr.rel (0) target = $region5
    $region4: #{tpu_custom_call.1} parent=1 // pred_region
      _
    $region5: #{tpu_custom_call.1} parent=1 // pred_fallthru
      _
    // Predicated region
    $region6: #{tpu_custom_call.1} parent=1 // pred_check
      _
    $region7: #{tpu_custom_call.1} parent=1 // pred_check_branch
      %16 = sbr.rel (0) target = $region9
    $region8: #{tpu_custom_call.1} parent=1 // pred_region
      _
    $region9: #{tpu_custom_call.1} parent=1 // pred_fallthru
      _
    // Predicated region
    $region10: #{tpu_custom_call.1} parent=1 // pred_check
      _
    $region11: #{tpu_custom_call.1} parent=1 // pred_check_branch
      %18 = sbr.rel (0) target = $region13
    $region12: #{tpu_custom_call.1} parent=1 // pred_region
      %s20 = ssub.s32 6144, 6144
      %21 = vsyncadd [#allocation3], %s20
      %s22 = sshll.u32 [#allocation2], 4
      %s23 = int_to_ptr.vmem [resolvable:$true] %s22
      %28 = dma.hbm_to_vmem [thread:$0]  %s2, 6144, %s23, [#allocation3], 128, 128, 8
    $region13: #{tpu_custom_call.1} parent=1 // pred_fallthru
      _
    // Predicated region
    $region14: #{tpu_custom_call.1} parent=1 // pred_check
      _
    $region15: #{tpu_custom_call.1} parent=1 // pred_check_branch
      %30 = sbr.rel (0) target = $region17
    $region16: #{tpu_custom_call.1} parent=1 // pred_region
      _
    $region17: #{tpu_custom_call.1} parent=1 // pred_fallthru
      _
    // Predicated region
    $region18: #{tpu_custom_call.1} parent=1 // pred_check
      _
    $region19: #{tpu_custom_call.1} parent=1 // pred_check_branch
      %32 = sbr.rel (0) target = $region21
    $region20: #{tpu_custom_call.1} parent=1 // pred_region
      _
    $region21: #{tpu_custom_call.1} parent=1 // pred_fallthru
      _
    // Predicated region
    $region22: #{tpu_custom_call.1} parent=1 // pred_check
      _
    $region23: #{tpu_custom_call.1} parent=1 // pred_check_branch
      %34 = sbr.rel (0) target = $region25
    $region24: #{tpu_custom_call.1} parent=1 // pred_region
      _
    $region25: #{tpu_custom_call.1} parent=1 // pred_fallthru
      _
    // Predicated region
    $region26: #{tpu_custom_call.1} parent=1 // pred_check
      _
    $region27: #{tpu_custom_call.1} parent=1 // pred_check_branch
      %36 = sbr.rel (0) target = $region29
    $region28: #{tpu_custom_call.1} parent=1 // pred_region
      %37 = dma.done [#allocation3], 6144
    $region29: #{tpu_custom_call.1} parent=1 // pred_fallthru
      _
    %v38 = vld [vmem:[%s0] sm:$0xff]
    %v39 = vld [vmem:[%s0 + $0x8] sm:$0xff]
    %v40 = vld [vmem:[%s0 + $0x18] sm:$0xff]
    %v41 = vld [vmem:[%s0 + $0x20] sm:$0xff]
    %v42 = vld [vmem:[%s0 + $0x2] sm:$0xff]
    %v43 = vld [vmem:[%s0 + $0xa] sm:$0xff]
    %v44 = vld [vmem:[%s0 + $0x1a] sm:$0xff]
    %v45 = vld [vmem:[%s0 + $0x22] sm:$0xff]
    %v46 = vld [vmem:[%s0 + $0x4] sm:$0xff]
    %v47 = vld [vmem:[%s0 + $0xc] sm:$0xff]
    %v48 = vld [vmem:[%s0 + $0x1c] sm:$0xff]
    %v49 = vld [vmem:[%s0 + $0x24] sm:$0xff]
    %v50 = vld [vmem:[#allocation2] sm:$0xff]
    %v51 = vld [vmem:[#allocation2 + $0x8] sm:$0xff]
    %v52 = vld [vmem:[#allocation2 + $0x10] sm:$0xff]
    %v53 = vld [vmem:[#allocation2 + $0x18] sm:$0xff]
    %v54 = vld [vmem:[#allocation2 + $0x20] sm:$0xff]
    %v55 = vld [vmem:[#allocation2 + $0x28] sm:$0xff]
    %v56 = vld [vmem:[#allocation2 + $0x30] sm:$0xff]
    %v57 = vld [vmem:[#allocation2 + $0x38] sm:$0xff]
    %v58 = vld [vmem:[#allocation2 + $0x40] sm:$0xff]
    %v59 = vld [vmem:[#allocation2 + $0x48] sm:$0xff]
    %v60 = vld [vmem:[#allocation2 + $0x50] sm:$0xff]
    %v61 = vld [vmem:[#allocation2 + $0x58] sm:$0xff]
    %v62 = vld [vmem:[#allocation2 + $0x60] sm:$0xff]
    %v63 = vld [vmem:[#allocation2 + $0x68] sm:$0xff]
    %v64 = vld [vmem:[#allocation2 + $0x70] sm:$0xff]
    %v65 = vld [vmem:[#allocation2 + $0x78] sm:$0xff]
    %v66 = vld [vmem:[#allocation2 + $0x80] sm:$0xff]
    %v67 = vld [vmem:[#allocation2 + $0x88] sm:$0xff]
    %v68 = vld [vmem:[#allocation2 + $0x90] sm:$0xff]
    %v69 = vld [vmem:[#allocation2 + $0x98] sm:$0xff]
    %v70 = vld [vmem:[#allocation2 + $0xa0] sm:$0xff]
    %v71 = vld [vmem:[#allocation2 + $0xa8] sm:$0xff]
    %v72 = vld [vmem:[#allocation2 + $0xb0] sm:$0xff]
    %v73 = vld [vmem:[#allocation2 + $0xb8] sm:$0xff]
    %v74 = vld [vmem:[#allocation2 + $0xc0] sm:$0xff]
    %v75 = vld [vmem:[#allocation2 + $0xc8] sm:$0xff]
    %v76 = vld [vmem:[#allocation2 + $0xd0] sm:$0xff]
    %v77 = vld [vmem:[#allocation2 + $0xd8] sm:$0xff]
    %v78 = vld [vmem:[#allocation2 + $0xe0] sm:$0xff]
    %v79 = vld [vmem:[#allocation2 + $0xe8] sm:$0xff]
    %v80 = vld [vmem:[#allocation2 + $0xf0] sm:$0xff]
    %v81 = vld [vmem:[#allocation2 + $0xf8] sm:$0xff]
    %v82 = vld [vmem:[#allocation2 + $0x100] sm:$0xff]
    %v83 = vld [vmem:[#allocation2 + $0x108] sm:$0xff]
    %v84 = vld [vmem:[#allocation2 + $0x110] sm:$0xff]
    %v85 = vld [vmem:[#allocation2 + $0x118] sm:$0xff]
    %v86 = vld [vmem:[#allocation2 + $0x120] sm:$0xff]
    %v87 = vld [vmem:[#allocation2 + $0x128] sm:$0xff]
    %v88 = vld [vmem:[#allocation2 + $0x130] sm:$0xff]
    %v89 = vld [vmem:[#allocation2 + $0x138] sm:$0xff]
    %v90 = vld [vmem:[#allocation2 + $0x140] sm:$0xff]
    %v91 = vld [vmem:[#allocation2 + $0x148] sm:$0xff]
    %v92 = vld [vmem:[#allocation2 + $0x150] sm:$0xff]
    %v93 = vld [vmem:[#allocation2 + $0x158] sm:$0xff]
    %v94 = vld [vmem:[#allocation2 + $0x160] sm:$0xff]
    %v95 = vld [vmem:[#allocation2 + $0x168] sm:$0xff]
    %v96 = vld [vmem:[#allocation2 + $0x170] sm:$0xff]
    %v97 = vld [vmem:[#allocation2 + $0x178] sm:$0xff]
    %v98 = vld [vmem:[%s3] sm:$0x1]
    %v100 = vlaneseq
    %v101 = vshrl.u32 %v100, 7
    %v102 = vsub.s32 0, %v101
    %v103 = vrot.slane %v98, %v102
    %105 = vmatprep.subr.mxu0 0.0
    %106 = vmatpush1.msra.mxu0 %v50
    %107 = vmatprep.subr.mxu0 0.0
    %108 = vmatpush1.msra.mxu0 %v51
    %109 = vmatprep.subr.mxu0 0.0
    %110 = vmatpush1.msra.mxu0 %v52
    %111 = vmatprep.subr.mxu0 0.0
    %112 = vmatpush1.msra.mxu0 %v53
    %113 = vmatprep.subr.mxu0 0.0
    %114 = vmatpush1.msra.mxu0 %v54
    %115 = vmatprep.subr.mxu0 0.0
    %116 = vmatpush1.msra.mxu0 %v55
    %117 = vmatprep.subr.mxu0 0.0
    %118 = vmatpush1.msra.mxu0 %v56
    %119 = vmatprep.subr.mxu0 0.0
    %120 = vmatpush1.msra.mxu0 %v57
    %121 = vmatprep.subr.mxu0 0.0
    %122 = vmatpush1.msra.mxu0 %v58
    %123 = vmatprep.subr.mxu0 0.0
    %124 = vmatpush1.msra.mxu0 %v59
    %125 = vmatprep.subr.mxu0 0.0
    %126 = vmatpush1.msra.mxu0 %v60
    %127 = vmatprep.subr.mxu0 0.0
    %128 = vmatpush1.msra.mxu0 %v61
    %129 = vmatprep.subr.mxu0 0.0
    %130 = vmatpush1.msra.mxu0 %v62
    %131 = vmatprep.subr.mxu0 0.0
    %132 = vmatpush1.msra.mxu0 %v63
    %133 = vmatprep.subr.mxu0 0.0
    %134 = vmatpush1.msra.mxu0 %v64
    %135 = vmatprep.subr.mxu0 0.0
    %136 = vmatpush1.msra.mxu0 %v65
    %137 = vmatprep.subr.mxu0 0.0
    %138 = vmatpush1.msra.mxu0 %v66
    %139 = vmatprep.subr.mxu0 0.0
    %140 = vmatpush1.msra.mxu0 %v67
    %141 = vmatprep.subr.mxu0 0.0
    %142 = vmatpush1.msra.mxu0 %v68
    %143 = vmatprep.subr.mxu0 0.0
    %144 = vmatpush1.msra.mxu0 %v69
    %145 = vmatprep.subr.mxu0 0.0
    %146 = vmatpush1.msra.mxu0 %v70
    %147 = vmatprep.subr.mxu0 0.0
    %148 = vmatpush1.msra.mxu0 %v71
    %149 = vmatprep.subr.mxu0 0.0
    %150 = vmatpush1.msra.mxu0 %v72
    %151 = vmatprep.subr.mxu0 0.0
    %152 = vmatpush1.msra.mxu0 %v73
    %153 = vmatprep.subr.mxu0 0.0
    %154 = vmatpush1.msra.mxu0 %v74
    %155 = vmatprep.subr.mxu0 0.0
    %156 = vmatpush1.msra.mxu0 %v75
    %157 = vmatprep.subr.mxu0 0.0
    %158 = vmatpush1.msra.mxu0 %v76
    %159 = vmatprep.subr.mxu0 0.0
    %160 = vmatpush1.msra.mxu0 %v77
    %161 = vmatprep.subr.mxu0 0.0
    %162 = vmatpush1.msra.mxu0 %v78
    %163 = vmatprep.subr.mxu0 0.0
    %164 = vmatpush1.msra.mxu0 %v79
    %165 = vmatprep.subr.mxu0 0.0
    %166 = vmatpush1.msra.mxu0 %v80
    %167 = vmatprep.subr.mxu0 0.0
    %168 = vmatpush1.msra.mxu0 %v81
    %169 = vmatprep.mubr.f32.mxu0 %v42
    %170 = vmatmul.mubr.f32.gmra.mrb[0].mxu0 %v38
    %v171 = vpop.f32.mrb[0].mxu0
    %v172 = vadd.f32 %v103, %v171
    %v173 = vpop.f32.mrb[0].mxu0
    %174 = vmatprep.mubr.f32.mxu0 %v43
    %175 = vmatmul.mubr.f32.gmra.mrb[0].mxu0 %v39
    %v176 = vpop.f32.mrb[0].mxu0
    %v177 = vadd.f32 %v103, %v176
    %v178 = vpop.f32.mrb[0].mxu0
    %179 = vmatprep.mubr.f32.mxu0 %v44
    %180 = vmatmul.mubr.f32.gmra.mrb[0].mxu0 %v40
    %v181 = vpop.f32.mrb[0].mxu0
    %v182 = vadd.f32 %v103, %v181
    %v183 = vpop.f32.mrb[0].mxu0
    %184 = vmatprep.mubr.f32.mxu0 %v45
    %185 = vmatmul.mubr.f32.gmra.mrb[0].mxu0 %v41
    %v186 = vpop.f32.mrb[0].mxu0
    %v187 = vadd.f32 %v103, %v186
    %v188 = vpop.f32.mrb[0].mxu0
    %189 = vdwg.mxu0
    %190 = vmatprep.subr.mxu0 0.0
    %191 = vmatpush1.msra.mxu0 %v82
    %192 = vmatprep.subr.mxu0 0.0
    %193 = vmatpush1.msra.mxu0 %v83
    %194 = vmatprep.subr.mxu0 0.0
    %195 = vmatpush1.msra.mxu0 %v84
    %196 = vmatprep.subr.mxu0 0.0
    %197 = vmatpush1.msra.mxu0 %v85
    %198 = vmatprep.subr.mxu0 0.0
    %199 = vmatpush1.msra.mxu0 %v86
    %200 = vmatprep.subr.mxu0 0.0
    %201 = vmatpush1.msra.mxu0 %v87
    %202 = vmatprep.subr.mxu0 0.0
    %203 = vmatpush1.msra.mxu0 %v88
    %204 = vmatprep.subr.mxu0 0.0
    %205 = vmatpush1.msra.mxu0 %v89
    %206 = vmatprep.subr.mxu0 0.0
    %207 = vmatpush1.msra.mxu0 %v90
    %208 = vmatprep.subr.mxu0 0.0
    %209 = vmatpush1.msra.mxu0 %v91
    %210 = vmatprep.subr.mxu0 0.0
    %211 = vmatpush1.msra.mxu0 %v92
    %212 = vmatprep.subr.mxu0 0.0
    %213 = vmatpush1.msra.mxu0 %v93
    %214 = vmatprep.subr.mxu0 0.0
    %215 = vmatpush1.msra.mxu0 %v94
    %216 = vmatprep.subr.mxu0 0.0
    %217 = vmatpush1.msra.mxu0 %v95
    %218 = vmatprep.subr.mxu0 0.0
    %219 = vmatpush1.msra.mxu0 %v96
    %220 = vmatprep.subr.mxu0 0.0
    %221 = vmatpush1.msra.mxu0 %v97
    %222 = vmatprep.subr.mxu0 0.0
    %223 = vmatpush1.msra.mxu0 0.0
    %224 = vmatprep.subr.mxu0 0.0
    %225 = vmatpush1.msra.mxu0 0.0
    %226 = vmatprep.subr.mxu0 0.0
    %227 = vmatpush1.msra.mxu0 0.0
    %228 = vmatprep.subr.mxu0 0.0
    %229 = vmatpush1.msra.mxu0 0.0
    %230 = vmatprep.subr.mxu0 0.0
    %231 = vmatpush1.msra.mxu0 0.0
    %232 = vmatprep.subr.mxu0 0.0
    %233 = vmatpush1.msra.mxu0 0.0
    %234 = vmatprep.subr.mxu0 0.0
    %235 = vmatpush1.msra.mxu0 0.0
    %236 = vmatprep.subr.mxu0 0.0
    %237 = vmatpush1.msra.mxu0 0.0
    %238 = vmatprep.subr.mxu0 0.0
    %239 = vmatpush1.msra.mxu0 0.0
    %240 = vmatprep.subr.mxu0 0.0
    %241 = vmatpush1.msra.mxu0 0.0
    %242 = vmatprep.subr.mxu0 0.0
    %243 = vmatpush1.msra.mxu0 0.0
    %244 = vmatprep.subr.mxu0 0.0
    %245 = vmatpush1.msra.mxu0 0.0
    %246 = vmatprep.subr.mxu0 0.0
    %247 = vmatpush1.msra.mxu0 0.0
    %248 = vmatprep.subr.mxu0 0.0
    %249 = vmatpush1.msra.mxu0 0.0
    %250 = vmatprep.subr.mxu0 0.0
    %251 = vmatpush1.msra.mxu0 0.0
    %252 = vmatprep.subr.mxu0 0.0
    %253 = vmatpush1.msra.mxu0 0.0
    %254 = vmatprep.mubr.f32.mxu0 0.0
    %255 = vmatmul.mubr.f32.gmra.mrb[0].mxu0 %v46
    %v256 = vpop.f32.mrb[0].mxu0
    %v257 = vadd.f32 %v172, %v256
    %v258 = vpop.f32.mrb[0].mxu0
    %259 = vmatprep.mubr.f32.mxu0 0.0
    %260 = vmatmul.mubr.f32.gmra.mrb[0].mxu0 %v47
    %v261 = vpop.f32.mrb[0].mxu0
    %v262 = vadd.f32 %v177, %v261
    %v263 = vpop.f32.mrb[0].mxu0
    %264 = vmatprep.mubr.f32.mxu0 0.0
    %265 = vmatmul.mubr.f32.gmra.mrb[0].mxu0 %v48
    %v266 = vpop.f32.mrb[0].mxu0
    %v267 = vadd.f32 %v182, %v266
    %v268 = vpop.f32.mrb[0].mxu0
    %269 = vmatprep.mubr.f32.mxu0 0.0
    %270 = vmatmul.mubr.f32.gmra.mrb[0].mxu0 %v49
    %v271 = vpop.f32.mrb[0].mxu0
    %v272 = vadd.f32 %v187, %v271
    %v273 = vpop.f32.mrb[0].mxu0
    %274 = vdwg.mxu0
    %v275 = vmax.f32 %v257, 0.0
    %v276 = vmax.f32 %v262, 0.0
    %v277 = vmax.f32 %v267, 0.0
    %v278 = vmax.f32 %v272, 0.0
    %v279 = vld [vmem:[%s4] sm:$0xff]
    %v280 = vld [vmem:[%s4 + $0x8] sm:$0xff]
    %v281 = vld [vmem:[%s4 + $0x10] sm:$0xff]
    %v282 = vld [vmem:[%s4 + $0x18] sm:$0xff]
    %v283 = vld [vmem:[%s4 + $0x20] sm:$0xff]
    %v284 = vld [vmem:[%s4 + $0x28] sm:$0xff]
    %v285 = vld [vmem:[%s4 + $0x30] sm:$0xff]
    %v286 = vld [vmem:[%s4 + $0x38] sm:$0xff]
    %v287 = vld [vmem:[%s4 + $0x40] sm:$0xff]
    %v288 = vld [vmem:[%s4 + $0x48] sm:$0xff]
    %v289 = vld [vmem:[%s4 + $0x50] sm:$0xff]
    %v290 = vld [vmem:[%s4 + $0x58] sm:$0xff]
    %v291 = vld [vmem:[%s4 + $0x60] sm:$0xff]
    %v292 = vld [vmem:[%s4 + $0x68] sm:$0xff]
    %v293 = vld [vmem:[%s4 + $0x70] sm:$0xff]
    %v294 = vld [vmem:[%s4 + $0x78] sm:$0xff]
    %v295 = vld [vmem:[%s5] sm:$0x1]
    %v297 = vlaneseq
    %v298 = vshrl.u32 %v297, 7
    %v299 = vsub.s32 0, %v298
    %v300 = vrot.slane %v295, %v299
    %302 = vmatprep.subr.mxu0 0.0
    %303 = vmatpush1.msra.mxu0 %v279
    %304 = vmatprep.subr.mxu0 0.0
    %305 = vmatpush1.msra.mxu0 %v280
    %306 = vmatprep.subr.mxu0 0.0
    %307 = vmatpush1.msra.mxu0 %v281
    %308 = vmatprep.subr.mxu0 0.0
    %309 = vmatpush1.msra.mxu0 %v282
    %310 = vmatprep.subr.mxu0 0.0
    %311 = vmatpush1.msra.mxu0 %v283
    %312 = vmatprep.subr.mxu0 0.0
    %313 = vmatpush1.msra.mxu0 %v284
    %314 = vmatprep.subr.mxu0 0.0
    %315 = vmatpush1.msra.mxu0 %v285
    %316 = vmatprep.subr.mxu0 0.0
    %317 = vmatpush1.msra.mxu0 %v286
    %318 = vmatprep.subr.mxu0 0.0
    %319 = vmatpush1.msra.mxu0 %v287
    %320 = vmatprep.subr.mxu0 0.0
    %321 = vmatpush1.msra.mxu0 %v288
    %322 = vmatprep.subr.mxu0 0.0
    %323 = vmatpush1.msra.mxu0 %v289
    %324 = vmatprep.subr.mxu0 0.0
    %325 = vmatpush1.msra.mxu0 %v290
    %326 = vmatprep.subr.mxu0 0.0
    %327 = vmatpush1.msra.mxu0 %v291
    %328 = vmatprep.subr.mxu0 0.0
    %329 = vmatpush1.msra.mxu0 %v292
    %330 = vmatprep.subr.mxu0 0.0
    %331 = vmatpush1.msra.mxu0 %v293
    %332 = vmatprep.subr.mxu0 0.0
    %333 = vmatpush1.msra.mxu0 %v294
    %334 = vmatprep.subr.mxu0 0.0
    %335 = vmatpush1.msra.mxu0 0.0
    %336 = vmatprep.subr.mxu0 0.0
    %337 = vmatpush1.msra.mxu0 0.0
    %338 = vmatprep.subr.mxu0 0.0
    %339 = vmatpush1.msra.mxu0 0.0
    %340 = vmatprep.subr.mxu0 0.0
    %341 = vmatpush1.msra.mxu0 0.0
    %342 = vmatprep.subr.mxu0 0.0
    %343 = vmatpush1.msra.mxu0 0.0
    %344 = vmatprep.subr.mxu0 0.0
    %345 = vmatpush1.msra.mxu0 0.0
    %346 = vmatprep.subr.mxu0 0.0
    %347 = vmatpush1.msra.mxu0 0.0
    %348 = vmatprep.subr.mxu0 0.0
    %349 = vmatpush1.msra.mxu0 0.0
    %350 = vmatprep.subr.mxu0 0.0
    %351 = vmatpush1.msra.mxu0 0.0
    %352 = vmatprep.subr.mxu0 0.0
    %353 = vmatpush1.msra.mxu0 0.0
    %354 = vmatprep.subr.mxu0 0.0
    %355 = vmatpush1.msra.mxu0 0.0
    %356 = vmatprep.subr.mxu0 0.0
    %357 = vmatpush1.msra.mxu0 0.0
    %358 = vmatprep.subr.mxu0 0.0
    %359 = vmatpush1.msra.mxu0 0.0
    %360 = vmatprep.subr.mxu0 0.0
    %361 = vmatpush1.msra.mxu0 0.0
    %362 = vmatprep.subr.mxu0 0.0
    %363 = vmatpush1.msra.mxu0 0.0
    %364 = vmatprep.subr.mxu0 0.0
    %365 = vmatpush1.msra.mxu0 0.0
    %366 = vmatprep.mubr.f32.mxu0 0.0
    %367 = vmatmul.mubr.f32.gmra.mrb[0].mxu0 %v275
    %v368 = vpop.f32.mrb[0].mxu0
    %v369 = vadd.f32 %v300, %v368
    %v370 = vpop.f32.mrb[0].mxu0
    %371 = vmatprep.mubr.f32.mxu0 0.0
    %372 = vmatmul.mubr.f32.gmra.mrb[0].mxu0 %v276
    %v373 = vpop.f32.mrb[0].mxu0
    %v374 = vadd.f32 %v300, %v373
    %v375 = vpop.f32.mrb[0].mxu0
    %376 = vmatprep.mubr.f32.mxu0 0.0
    %377 = vmatmul.mubr.f32.gmra.mrb[0].mxu0 %v277
    %v378 = vpop.f32.mrb[0].mxu0
    %v379 = vadd.f32 %v300, %v378
    %v380 = vpop.f32.mrb[0].mxu0
    %381 = vmatprep.mubr.f32.mxu0 0.0
    %382 = vmatmul.mubr.f32.gmra.mrb[0].mxu0 %v278
    %v383 = vpop.f32.mrb[0].mxu0
    %v384 = vadd.f32 %v300, %v383
    %v385 = vpop.f32.mrb[0].mxu0
    %386 = vdwg.mxu0
    %v387 = vadd.f32 %v42, %v369
    %v388 = vadd.f32 %v43, %v374
    %v389 = vadd.f32 %v44, %v379
    %v390 = vadd.f32 %v45, %v384
    %v391 = vld [vmem:[%s1] sm:$0xff]
    %v392 = vld [vmem:[%s1 + $0x8] sm:$0xff]
    %v393 = vld [vmem:[%s1 + $0x10] sm:$0xff]
    %v394 = vld [vmem:[%s1 + $0x18] sm:$0xff]
    %396 = vset.pattern.permute.xlu0 0
    %397 = vperm.xlu0 %396, %v391
    %v398 = vpop.permute.xlu0 %397
    %401 = vset.pattern.permute.xlu0 0
    %402 = vperm.xlu0 %401, %v392
    %v403 = vpop.permute.xlu0 %402
    %406 = vset.pattern.permute.xlu0 0
    %407 = vperm.xlu0 %406, %v393
    %v408 = vpop.permute.xlu0 %407
    %411 = vset.pattern.permute.xlu0 0
    %412 = vperm.xlu0 %411, %v394
    %v413 = vpop.permute.xlu0 %412
    %v415 = vmul.f32 %v387, %v398
    %v416 = vmul.f32 %v388, %v403
    %v417 = vmul.f32 %v389, %v408
    %v418 = vmul.f32 %v390, %v413
    %419 = vst [vmem:[#allocation5] sm:$0xff] %v415
    %420 = vst [vmem:[#allocation5 + $0x8] sm:$0xff] %v416
    %421 = vst [vmem:[#allocation5 + $0x10] sm:$0xff] %v417
    %422 = vst [vmem:[#allocation5 + $0x18] sm:$0xff] %v418
    // Predicated region
    $region30: #{tpu_custom_call.1} parent=1 // pred_check
      _
    $region31: #{tpu_custom_call.1} parent=1 // pred_check_branch
      %424 = sbr.rel (0) target = $region33
    $region32: #{tpu_custom_call.1} parent=1 // pred_region
      %s426 = ssub.s32 512, 512
      %427 = vsyncadd [#allocation4], %s426
      %s428 = sshll.u32 [#allocation5], 4
      %s429 = int_to_ptr.vmem [resolvable:$true] %s428
      %434 = dma.vmem_to_hbm [thread:$0]  %s429, 512, %s6, [#allocation4], 128, 128, 8
    $region33: #{tpu_custom_call.1} parent=1 // pred_fallthru
      _
    // Predicated region
    $region34: #{tpu_custom_call.1} parent=1 // pred_check
      _
    $region35: #{tpu_custom_call.1} parent=1 // pred_check_branch
      %436 = sbr.rel (0) target = $region37
    $region36: #{tpu_custom_call.1} parent=1 // pred_region
      %437 = dma.done [#allocation4], 512
    $region37: #{tpu_custom_call.1} parent=1 // pred_fallthru
      _
    %438 = vsyncpa [#allocation3], 1
    %439 = vsyncpa [#allocation4], 1

</llo_original>
